<compile_context>
chip_gen: v7x
topology: tpu7x:2x2x1
jax: 0.10.0
libtpu: 0.0.40
codegen_flags: <defaults>
</compile_context>

<pallas_src>
import jax
import jax.numpy as jnp
from jax import lax
from jax.experimental import pallas as pl
from jax.experimental.pallas import tpu as pltpu

_LANE = 128


def _round_up(x, m):
    return -(-x // m) * m


def _discriminator_kernel(emb_ref, w12_ref, bvec_ref, b3_ref, out_ref):
    """One row tile of the fused 3-layer MLP, entirely in VMEM."""
    x = emb_ref[...]                                                # (tm, H) f32

    # Layer 1: Linear(H, H) + ReLU  (MXU, f32 accumulate).
    h1 = jnp.dot(x, w12_ref[0], preferred_element_type=jnp.float32)
    h1 = jnp.maximum(h1 + bvec_ref[0], 0.0)

    # Layer 2: Linear(H, H) + ReLU.
    h2 = jnp.dot(h1, w12_ref[1], preferred_element_type=jnp.float32)
    h2 = jnp.maximum(h2 + bvec_ref[1], 0.0)

    # Layer 3: Linear(H, 1) as (1,H) x (tm,H) contracting the H axis on the
    # MXU.  The result is already the lane-dense (1, tm) output slab, so no
    # cross-lane reduction or sublane->lane relayout (XLU) remains.
    logit = lax.dot_general(
        bvec_ref[2], h2,
        dimension_numbers=(((1,), (1,)), ((), ())),
        preferred_element_type=jnp.float32)                         # (1, tm)

    out_ref[...] = (logit + b3_ref[0]).astype(out_ref.dtype)


def _const_spec(block_shape, index_map):
    """BlockSpec for grid-invariant operands: single-buffered when supported."""
    try:
        return pl.BlockSpec(block_shape, index_map, pipeline_mode=pl.Buffered(1))
    except (TypeError, AttributeError):   # older BlockSpec without pipeline_mode
        return pl.BlockSpec(block_shape, index_map)


def _choose_tile(n, max_tm=1024):
    """Pick row-tile size tm and padded row count (both multiples of 128)."""
    n_pad = _round_up(max(n, 1), _LANE)
    if n_pad <= 256:
        return n_pad, n_pad                      # one fat step, zero grid overhead
    if n_pad <= max_tm:
        # >= 2 grid steps so the "parallel" axis can shard across v7x's 2 TCs.
        tm = _round_up(-(-n_pad // 2), _LANE)
        return tm, 2 * tm
    tm = max_tm
    return tm, _round_up(n_pad, tm)


def discriminator_forward(emb, params, *, max_tm=1024):
    """emb: (N, H) float32. params: dict of w1,b1,w2,b2,w3,b3. Returns (N, 1)."""
    N, H = emb.shape
    tm, n_pad = _choose_tile(N, max_tm)

    # Pack parameters to minimize DMA descriptors (all grid-invariant):
    #   w12  = w1|w2 stacked        -> one contiguous (2, H, H) DMA
    #   bvec = b1|b2|w3(as a row)   -> one contiguous (3, 1, H) DMA
    #   b3   = true scalar in SMEM
    w12 = jnp.stack([params["w1"], params["w2"]], axis=0)            # (2, H, H)
    bvec = jnp.stack([params["b1"].reshape(1, H),
                      params["b2"].reshape(1, H),
                      params["w3"].reshape(1, H)], axis=0)           # (3, 1, H)
    b3 = params["b3"].reshape((1,))

    emb_p = emb if n_pad == N else jnp.pad(emb, ((0, n_pad - N), (0, 0)))
    grid = (n_pad // tm,)

    # VMEM budget: single-buffered resident weights + double-buffered emb/out
    # tiles + slack for the h1/h2 intermediates; floor at the 32 MiB scoped
    # default, cap at physical (helps v5e's 16 MiB default as H grows).
    est = (2 * H * H + 3 * H) * 4                 # packed weights (1 buffer)
    est += 2 * (tm * H + 8 * tm) * 4              # emb tiles + out slab (2 buffers)
    est += 4 * tm * H * 4                         # h1/h2 intermediates, headroom
    vmem_limit = int(min(128 * 1024 * 1024, max(32 * 1024 * 1024, 2 * est)))

    out = pl.pallas_call(
        _discriminator_kernel,
        out_shape=jax.ShapeDtypeStruct((1, n_pad), emb.dtype),
        grid_spec=pltpu.PrefetchScalarGridSpec(
            num_scalar_prefetch=0,
            grid=grid,
            in_specs=[
                pl.BlockSpec((tm, H), lambda i: (i, 0)),             # emb rows
                _const_spec((2, H, H), lambda i: (0, 0, 0)),         # w1 | w2
                _const_spec((3, 1, H), lambda i: (0, 0, 0)),         # b1|b2|w3
                pl.BlockSpec(memory_space=pltpu.MemorySpace.SMEM),   # b3 scalar
            ],
            # Lane-dense output slab: batch rows on the lane axis -> unmasked vst.
            out_specs=pl.BlockSpec((1, tm), lambda i: (0, i)),
        ),
        compiler_params=pltpu.CompilerParams(
            dimension_semantics=("parallel",),
            vmem_limit_bytes=vmem_limit),
    )(emb_p, w12, bvec, b3)

    # Back to the PyTorch (N, 1) layout; drop padded rows.
    return out[0, :N].reshape(N, 1)


def init_params(key, hidden_size):
    """Deterministic synthetic parameters (shapes match the nn.Linear layers)."""
    ks = jax.random.split(key, 6)
    scale = 1.0 / jnp.sqrt(hidden_size)
    return {
        "w1": jax.random.normal(ks[0], (hidden_size, hidden_size), jnp.float32) * scale,
        "b1": jax.random.normal(ks[1], (1, hidden_size), jnp.float32) * scale,
        "w2": jax.random.normal(ks[2], (hidden_size, hidden_size), jnp.float32) * scale,
        "b2": jax.random.normal(ks[3], (1, hidden_size), jnp.float32) * scale,
        "w3": jax.random.normal(ks[4], (hidden_size, 1), jnp.float32) * scale,
        "b3": jax.random.normal(ks[5], (1, 1), jnp.float32) * scale,
    }


def reference_forward(emb, p):
    h1 = jnp.maximum(emb @ p["w1"] + p["b1"], 0.0)
    h2 = jnp.maximum(h1 @ p["w2"] + p["b2"], 0.0)
    return h2 @ p["w3"] + p["b3"]


if __name__ == "__main__":
    # args.conv != 'both' -> hidden_size = args.hidden_size = 32
    hidden_size = 32
    batch = 16

    key = jax.random.PRNGKey(0)
    k_emb, k_par, k_big = jax.random.split(key, 3)
    params = init_params(k_par, hidden_size)

    # Shipped tiny config: single padded 128-row tile, grid = (1,).
    emb = jax.random.normal(k_emb, (batch, hidden_size), jnp.float32)
    out = jax.block_until_ready(discriminator_forward(emb, params))
    ref = reference_forward(emb, params)
    assert out.shape == (batch, 1)
    assert jnp.allclose(out, ref, atol=1e-4, rtol=1e-4), "mismatch vs reference (small)"

    # Exercise the padded multi-step grid path (300 rows -> 2 x 256-row tiles).
    emb_big = jax.random.normal(k_big, (300, hidden_size), jnp.float32)
    out_big = jax.block_until_ready(discriminator_forward(emb_big, params))
    ref_big = reference_forward(emb_big, params)
    assert out_big.shape == (300, 1)
    assert jnp.allclose(out_big, ref_big, atol=1e-4, rtol=1e-4), "mismatch vs reference (big)"

    print("KERNEL_OK")
</pallas_src>

<mosaic_0001>
module attributes {stable_mosaic.version = 11 : i64} {
  func.func @_discriminator_kernel(%arg0: i32, %arg1: memref<128x32xf32, #tpu.memory_space<vmem>>, %arg2: memref<2x32x32xf32, #tpu.memory_space<vmem>>, %arg3: memref<3x1x32xf32, #tpu.memory_space<vmem>>, %arg4: memref<1xf32, #tpu.memory_space<smem>>, %arg5: memref<1x128xf32, #tpu.memory_space<vmem>>) attributes {dimension_semantics = [#tpu.dimension_semantics<parallel>], iteration_bounds = array<i64: 1>, scalar_prefetch = 0 : i64, scratch_operands = 0 : i64, tpu.core_type = #tpu.core_type<tc>, window_params = [{transform_indices = @transform_0, window_bounds = array<i64: 128, 32>}, {pipeline_mode = #tpu.pipeline_mode<synchronous>, transform_indices = @transform_1, window_bounds = array<i64: 2, 32, 32>}, {pipeline_mode = #tpu.pipeline_mode<synchronous>, transform_indices = @transform_2, window_bounds = array<i64: 3, 1, 32>}, {transform_indices = @transform_3, window_bounds = array<i64: 1>}, {transform_indices = @transform_4, window_bounds = array<i64: 1, 128>}]} {
    %c0 = arith.constant 0 : index
    %c0_0 = arith.constant 0 : index
    %0 = vector.load %arg1[%c0, %c0_0] : memref<128x32xf32, #tpu.memory_space<vmem>>, vector<128x32xf32>
    %c0_1 = arith.constant 0 : index
    %c0_2 = arith.constant 0 : index
    %c0_3 = arith.constant 0 : index
    %1 = vector.load %arg2[%c0_1, %c0_2, %c0_3] : memref<2x32x32xf32, #tpu.memory_space<vmem>>, vector<1x32x32xf32>
    %2 = vector.shape_cast %1 : vector<1x32x32xf32> to vector<32x32xf32>
    %cst = arith.constant dense<0.000000e+00> : vector<128x32xf32>
    %3 = tpu.matmul %0, %2, %cst {dimension_numbers = #tpu.dot_dimension_numbers<[1], [0], [0], [1], [0, 0, 1, 1], [], []>} : vector<128x32xf32>, vector<32x32xf32>, vector<128x32xf32> -> vector<128x32xf32>
    %c0_4 = arith.constant 0 : index
    %c0_5 = arith.constant 0 : index
    %c0_6 = arith.constant 0 : index
    %4 = vector.load %arg3[%c0_4, %c0_5, %c0_6] : memref<3x1x32xf32, #tpu.memory_space<vmem>>, vector<1x1x32xf32>
    %5 = vector.shape_cast %4 : vector<1x1x32xf32> to vector<1x32xf32>
    %6 = vector.broadcast %5 : vector<1x32xf32> to vector<128x32xf32>
    %7 = arith.addf %3, %6 : vector<128x32xf32>
    %cst_7 = arith.constant 0.000000e+00 : f32
    %8 = vector.broadcast %cst_7 : f32 to vector<128x32xf32>
    %9 = arith.maximumf %7, %8 : vector<128x32xf32>
    %c1 = arith.constant 1 : index
    %c0_8 = arith.constant 0 : index
    %c0_9 = arith.constant 0 : index
    %10 = vector.load %arg2[%c1, %c0_8, %c0_9] : memref<2x32x32xf32, #tpu.memory_space<vmem>>, vector<1x32x32xf32>
    %11 = vector.shape_cast %10 : vector<1x32x32xf32> to vector<32x32xf32>
    %cst_10 = arith.constant dense<0.000000e+00> : vector<128x32xf32>
    %12 = tpu.matmul %9, %11, %cst_10 {dimension_numbers = #tpu.dot_dimension_numbers<[1], [0], [0], [1], [0, 0, 1, 1], [], []>} : vector<128x32xf32>, vector<32x32xf32>, vector<128x32xf32> -> vector<128x32xf32>
    %c1_11 = arith.constant 1 : index
    %c0_12 = arith.constant 0 : index
    %c0_13 = arith.constant 0 : index
    %13 = vector.load %arg3[%c1_11, %c0_12, %c0_13] : memref<3x1x32xf32, #tpu.memory_space<vmem>>, vector<1x1x32xf32>
    %14 = vector.shape_cast %13 : vector<1x1x32xf32> to vector<1x32xf32>
    %15 = vector.broadcast %14 : vector<1x32xf32> to vector<128x32xf32>
    %16 = arith.addf %12, %15 : vector<128x32xf32>
    %cst_14 = arith.constant 0.000000e+00 : f32
    %17 = vector.broadcast %cst_14 : f32 to vector<128x32xf32>
    %18 = arith.maximumf %16, %17 : vector<128x32xf32>
    %c2 = arith.constant 2 : index
    %c0_15 = arith.constant 0 : index
    %c0_16 = arith.constant 0 : index
    %19 = vector.load %arg3[%c2, %c0_15, %c0_16] : memref<3x1x32xf32, #tpu.memory_space<vmem>>, vector<1x1x32xf32>
    %20 = vector.shape_cast %19 : vector<1x1x32xf32> to vector<1x32xf32>
    %cst_17 = arith.constant dense<0.000000e+00> : vector<1x128xf32>
    %21 = tpu.matmul %20, %18, %cst_17 {dimension_numbers = #tpu.dot_dimension_numbers<[1], [1], [0], [0], [0, 0, 1, 0], [], []>} : vector<1x32xf32>, vector<128x32xf32>, vector<1x128xf32> -> vector<1x128xf32>
    %c0_18 = arith.constant 0 : index
    %22 = memref.load %arg4[%c0_18] : memref<1xf32, #tpu.memory_space<smem>>
    %23 = vector.broadcast %22 : f32 to vector<1x128xf32>
    %24 = arith.addf %21, %23 : vector<1x128xf32>
    %c0_19 = arith.constant 0 : index
    %c0_20 = arith.constant 0 : index
    %25 = vector.load %arg5[%c0_19, %c0_20] : memref<1x128xf32, #tpu.memory_space<vmem>>, vector<1x128xf32>
    tpu.vector_store %arg5[%c0_19, %c0_20], %24 {strides = array<i32>} : memref<1x128xf32, #tpu.memory_space<vmem>>, vector<1x128xf32>,
    return
  }
  func.func @transform_0(%arg0: i32) -> (i32, i32) {
    %c0_i32 = arith.constant 0 : i32
    %c0_i32_0 = arith.constant 0 : i32
    return %arg0, %c0_i32 : i32, i32
  }
  func.func @transform_1(%arg0: i32) -> (i32, i32, i32) {
    %c0_i32 = arith.constant 0 : i32
    %c0_i32_0 = arith.constant 0 : i32
    %c0_i32_1 = arith.constant 0 : i32
    %c0_i32_2 = arith.constant 0 : i32
    return %c0_i32, %c0_i32_0, %c0_i32_1 : i32, i32, i32
  }
  func.func @transform_2(%arg0: i32) -> (i32, i32, i32) {
    %c0_i32 = arith.constant 0 : i32
    %c0_i32_0 = arith.constant 0 : i32
    %c0_i32_1 = arith.constant 0 : i32
    %c0_i32_2 = arith.constant 0 : i32
    return %c0_i32, %c0_i32_0, %c0_i32_1 : i32, i32, i32
  }
  func.func @transform_3(%arg0: i32) -> i32 {
    %c0_i32 = arith.constant 0 : i32
    %c0_i32_0 = arith.constant 0 : i32
    return %c0_i32 : i32
  }
  func.func @transform_4(%arg0: i32) -> (i32, i32) {
    %c0_i32 = arith.constant 0 : i32
    %c0_i32_0 = arith.constant 0 : i32
    return %c0_i32, %arg0 : i32, i32
  }
}

</mosaic_0001>

<llo_original>
// kernel: tpu_custom_call.1
$region0: #{tpu_custom_call.1}
  #allocation0 [shape = 'u32[]', space=smem, size = 0x4, offset = 0x4, fixed_abs, tag = 'smem constant byte address 0x4 - core index']
  #allocation1 [shape = 'u32[144,128]{1,0:T(1,128)}', space=vmem, size = 0x12000, scoped, tag = 'internal scratch']
  #allocation2 [shape = 'f32[1]{0:T(128)S(6)}', space=smem, size = 0x200, scoped, tag = 'scoped memory for tpu_custom_call.1']
  %s0 = inlined_call_operand.vmem [shape: f32[128,32], index: 0, kind: input, shape index: {}]
  %s1 = inlined_call_operand.vmem [shape: f32[2,32,32], index: 1, kind: input, shape index: {}]
  %s2 = inlined_call_operand.vmem [shape: f32[3,1,32], index: 2, kind: input, shape index: {}]
  %s3 = inlined_call_operand.<no memory space> [shape: f32[1], index: 3, kind: input, shape index: {}]
  %s4 = inlined_call_operand.hbm [shape: f32[1,128], index: 4, kind: output, shape index: {}]
  %s5 = sld [smem:[#allocation0]]
  $region26: #{tpu_custom_call.1} parent=0
    _
  %s7 = ssub.s32 1, %s5
  %s8 = scalar_select 0, %s7, %s5
  %9 = sst [smem:[#allocation2]] %s3
  $region1: #{tpu_custom_call.1} parent=0
    #allocation3 [shape = 'u8[512]{0}', space=vmem, size = 0x400, scoped, tag = 'output window, operand 0, single buffered']
    #allocation4 [shape = 's32[1]{0}', space=sflag, size = 0x4, scoped, tag = 'scoped memory for tpu_custom_call.1']
    %10 = vsyncpa [#allocation4], 0
    // Predicated region
    $region2: #{tpu_custom_call.1} parent=1 // pred_check
      _
    $region3: #{tpu_custom_call.1} parent=1 // pred_check_branch
      %12 = sbr.rel (0) target = $region5
    $region4: #{tpu_custom_call.1} parent=1 // pred_region
      _
    $region5: #{tpu_custom_call.1} parent=1 // pred_fallthru
      _
    // Predicated region
    $region6: #{tpu_custom_call.1} parent=1 // pred_check
      _
    $region7: #{tpu_custom_call.1} parent=1 // pred_check_branch
      %14 = sbr.rel (0) target = $region9
    $region8: #{tpu_custom_call.1} parent=1 // pred_region
      _
    $region9: #{tpu_custom_call.1} parent=1 // pred_fallthru
      _
    // Predicated region
    $region10: #{tpu_custom_call.1} parent=1 // pred_check
      _
    $region11: #{tpu_custom_call.1} parent=1 // pred_check_branch
      %16 = sbr.rel (0) target = $region13
    $region12: #{tpu_custom_call.1} parent=1 // pred_region
      _
    $region13: #{tpu_custom_call.1} parent=1 // pred_fallthru
      _
    // Predicated region
    $region14: #{tpu_custom_call.1} parent=1 // pred_check
      _
    $region15: #{tpu_custom_call.1} parent=1 // pred_check_branch
      %18 = sbr.rel (0) target = $region17
    $region16: #{tpu_custom_call.1} parent=1 // pred_region
      _
    $region17: #{tpu_custom_call.1} parent=1 // pred_fallthru
      _
    %v19 = vld [vmem:[%s0] sm:$0xff]
    %v20 = vld [vmem:[%s0 + $0x8] sm:$0xff]
    %v21 = vld [vmem:[%s0 + $0x10] sm:$0xff]
    %v22 = vld [vmem:[%s0 + $0x18] sm:$0xff]
    %v23 = vld [vmem:[%s0 + $0x20] sm:$0xff]
    %v24 = vld [vmem:[%s0 + $0x28] sm:$0xff]
    %v25 = vld [vmem:[%s0 + $0x30] sm:$0xff]
    %v26 = vld [vmem:[%s0 + $0x38] sm:$0xff]
    %v27 = vld [vmem:[%s0 + $0x40] sm:$0xff]
    %v28 = vld [vmem:[%s0 + $0x48] sm:$0xff]
    %v29 = vld [vmem:[%s0 + $0x50] sm:$0xff]
    %v30 = vld [vmem:[%s0 + $0x58] sm:$0xff]
    %v31 = vld [vmem:[%s0 + $0x60] sm:$0xff]
    %v32 = vld [vmem:[%s0 + $0x68] sm:$0xff]
    %v33 = vld [vmem:[%s0 + $0x70] sm:$0xff]
    %v34 = vld [vmem:[%s0 + $0x78] sm:$0xff]
    %v35 = vld [vmem:[%s1] sm:$0xff]
    %v36 = vld [vmem:[%s1 + $0x8] sm:$0xff]
    %v37 = vld [vmem:[%s1 + $0x10] sm:$0xff]
    %v38 = vld [vmem:[%s1 + $0x18] sm:$0xff]
    %v39 = vld [vmem:[%s2] sm:$0x1]
    %v41 = vlaneseq
    %v42 = vshrl.u32 %v41, 7
    %v43 = vsub.s32 0, %v42
    %v44 = vrot.slane %v39, %v43
    %vm46 = vcmask 261120
    %v48 = vsel %vm46, %v19, 0
    %v51 = vsel %vm46, %v20, 0
    %v54 = vsel %vm46, %v21, 0
    %v57 = vsel %vm46, %v22, 0
    %v60 = vsel %vm46, %v23, 0
    %v63 = vsel %vm46, %v24, 0
    %v66 = vsel %vm46, %v25, 0
    %v69 = vsel %vm46, %v26, 0
    %v72 = vsel %vm46, %v27, 0
    %v75 = vsel %vm46, %v28, 0
    %v78 = vsel %vm46, %v29, 0
    %v81 = vsel %vm46, %v30, 0
    %v84 = vsel %vm46, %v31, 0
    %v87 = vsel %vm46, %v32, 0
    %v90 = vsel %vm46, %v33, 0
    %v93 = vsel %vm46, %v34, 0
    %95 = vmatprep.subr.mxu0 0.0
    %96 = vmatpush1.msra.mxu0 %v35
    %97 = vmatprep.subr.mxu0 0.0
    %98 = vmatpush1.msra.mxu0 %v36
    %99 = vmatprep.subr.mxu0 0.0
    %100 = vmatpush1.msra.mxu0 %v37
    %101 = vmatprep.subr.mxu0 0.0
    %102 = vmatpush1.msra.mxu0 %v38
    %103 = vmatprep.subr.mxu0 0.0
    %104 = vmatpush1.msra.mxu0 0.0
    %105 = vmatprep.subr.mxu0 0.0
    %106 = vmatpush1.msra.mxu0 0.0
    %107 = vmatprep.subr.mxu0 0.0
    %108 = vmatpush1.msra.mxu0 0.0
    %109 = vmatprep.subr.mxu0 0.0
    %110 = vmatpush1.msra.mxu0 0.0
    %111 = vmatprep.subr.mxu0 0.0
    %112 = vmatpush1.msra.mxu0 0.0
    %113 = vmatprep.subr.mxu0 0.0
    %114 = vmatpush1.msra.mxu0 0.0
    %115 = vmatprep.subr.mxu0 0.0
    %116 = vmatpush1.msra.mxu0 0.0
    %117 = vmatprep.subr.mxu0 0.0
    %118 = vmatpush1.msra.mxu0 0.0
    %119 = vmatprep.subr.mxu0 0.0
    %120 = vmatpush1.msra.mxu0 0.0
    %121 = vmatprep.subr.mxu0 0.0
    %122 = vmatpush1.msra.mxu0 0.0
    %123 = vmatprep.subr.mxu0 0.0
    %124 = vmatpush1.msra.mxu0 0.0
    %125 = vmatprep.subr.mxu0 0.0
    %126 = vmatpush1.msra.mxu0 0.0
    %127 = vmatprep.subr.mxu0 0.0
    %128 = vmatpush1.msra.mxu0 0.0
    %129 = vmatprep.subr.mxu0 0.0
    %130 = vmatpush1.msra.mxu0 0.0
    %131 = vmatprep.subr.mxu0 0.0
    %132 = vmatpush1.msra.mxu0 0.0
    %133 = vmatprep.subr.mxu0 0.0
    %134 = vmatpush1.msra.mxu0 0.0
    %135 = vmatprep.subr.mxu0 0.0
    %136 = vmatpush1.msra.mxu0 0.0
    %137 = vmatprep.subr.mxu0 0.0
    %138 = vmatpush1.msra.mxu0 0.0
    %139 = vmatprep.subr.mxu0 0.0
    %140 = vmatpush1.msra.mxu0 0.0
    %141 = vmatprep.subr.mxu0 0.0
    %142 = vmatpush1.msra.mxu0 0.0
    %143 = vmatprep.subr.mxu0 0.0
    %144 = vmatpush1.msra.mxu0 0.0
    %145 = vmatprep.subr.mxu0 0.0
    %146 = vmatpush1.msra.mxu0 0.0
    %147 = vmatprep.subr.mxu0 0.0
    %148 = vmatpush1.msra.mxu0 0.0
    %149 = vmatprep.subr.mxu0 0.0
    %150 = vmatpush1.msra.mxu0 0.0
    %151 = vmatprep.subr.mxu0 0.0
    %152 = vmatpush1.msra.mxu0 0.0
    %153 = vmatprep.subr.mxu0 0.0
    %154 = vmatpush1.msra.mxu0 0.0
    %155 = vmatprep.subr.mxu0 0.0
    %156 = vmatpush1.msra.mxu0 0.0
    %157 = vmatprep.subr.mxu0 0.0
    %158 = vmatpush1.msra.mxu0 0.0
    %159 = vmatprep.mubr.f32.mxu0 0.0
    %160 = vmatmul.mubr.f32.gmra.mrb[0].mxu0 %v48
    %v161 = vpop.f32.mrb[0].mxu0
    %v162 = vadd.f32 %v44, %v161
    %v163 = vpop.f32.mrb[0].mxu0
    %164 = vmatprep.mubr.f32.mxu0 0.0
    %165 = vmatmul.mubr.f32.gmra.mrb[0].mxu0 %v51
    %v166 = vpop.f32.mrb[0].mxu0
    %v167 = vadd.f32 %v44, %v166
    %v168 = vpop.f32.mrb[0].mxu0
    %169 = vmatprep.mubr.f32.mxu0 0.0
    %170 = vmatmul.mubr.f32.gmra.mrb[0].mxu0 %v54
    %v171 = vpop.f32.mrb[0].mxu0
    %v172 = vadd.f32 %v44, %v171
    %v173 = vpop.f32.mrb[0].mxu0
    %174 = vmatprep.mubr.f32.mxu0 0.0
    %175 = vmatmul.mubr.f32.gmra.mrb[0].mxu0 %v57
    %v176 = vpop.f32.mrb[0].mxu0
    %v177 = vadd.f32 %v44, %v176
    %v178 = vpop.f32.mrb[0].mxu0
    %179 = vmatprep.mubr.f32.mxu0 0.0
    %180 = vmatmul.mubr.f32.gmra.mrb[0].mxu0 %v60
    %v181 = vpop.f32.mrb[0].mxu0
    %v182 = vadd.f32 %v44, %v181
    %v183 = vpop.f32.mrb[0].mxu0
    %184 = vmatprep.mubr.f32.mxu0 0.0
    %185 = vmatmul.mubr.f32.gmra.mrb[0].mxu0 %v63
    %v186 = vpop.f32.mrb[0].mxu0
    %v187 = vadd.f32 %v44, %v186
    %v188 = vpop.f32.mrb[0].mxu0
    %189 = vmatprep.mubr.f32.mxu0 0.0
    %190 = vmatmul.mubr.f32.gmra.mrb[0].mxu0 %v66
    %v191 = vpop.f32.mrb[0].mxu0
    %v192 = vadd.f32 %v44, %v191
    %v193 = vpop.f32.mrb[0].mxu0
    %194 = vmatprep.mubr.f32.mxu0 0.0
    %195 = vmatmul.mubr.f32.gmra.mrb[0].mxu0 %v69
    %v196 = vpop.f32.mrb[0].mxu0
    %v197 = vadd.f32 %v44, %v196
    %v198 = vpop.f32.mrb[0].mxu0
    %199 = vmatprep.mubr.f32.mxu0 0.0
    %200 = vmatmul.mubr.f32.gmra.mrb[0].mxu0 %v72
    %v201 = vpop.f32.mrb[0].mxu0
    %v202 = vadd.f32 %v44, %v201
    %v203 = vpop.f32.mrb[0].mxu0
    %204 = vmatprep.mubr.f32.mxu0 0.0
    %205 = vmatmul.mubr.f32.gmra.mrb[0].mxu0 %v75
    %v206 = vpop.f32.mrb[0].mxu0
    %v207 = vadd.f32 %v44, %v206
    %v208 = vpop.f32.mrb[0].mxu0
    %209 = vmatprep.mubr.f32.mxu0 0.0
    %210 = vmatmul.mubr.f32.gmra.mrb[0].mxu0 %v78
    %v211 = vpop.f32.mrb[0].mxu0
    %v212 = vadd.f32 %v44, %v211
    %v213 = vpop.f32.mrb[0].mxu0
    %214 = vmatprep.mubr.f32.mxu0 0.0
    %215 = vmatmul.mubr.f32.gmra.mrb[0].mxu0 %v81
    %v216 = vpop.f32.mrb[0].mxu0
    %v217 = vadd.f32 %v44, %v216
    %v218 = vpop.f32.mrb[0].mxu0
    %219 = vmatprep.mubr.f32.mxu0 0.0
    %220 = vmatmul.mubr.f32.gmra.mrb[0].mxu0 %v84
    %v221 = vpop.f32.mrb[0].mxu0
    %v222 = vadd.f32 %v44, %v221
    %v223 = vpop.f32.mrb[0].mxu0
    %224 = vmatprep.mubr.f32.mxu0 0.0
    %225 = vmatmul.mubr.f32.gmra.mrb[0].mxu0 %v87
    %v226 = vpop.f32.mrb[0].mxu0
    %v227 = vadd.f32 %v44, %v226
    %v228 = vpop.f32.mrb[0].mxu0
    %229 = vmatprep.mubr.f32.mxu0 0.0
    %230 = vmatmul.mubr.f32.gmra.mrb[0].mxu0 %v90
    %v231 = vpop.f32.mrb[0].mxu0
    %v232 = vadd.f32 %v44, %v231
    %v233 = vpop.f32.mrb[0].mxu0
    %234 = vmatprep.mubr.f32.mxu0 0.0
    %235 = vmatmul.mubr.f32.gmra.mrb[0].mxu0 %v93
    %v236 = vpop.f32.mrb[0].mxu0
    %v237 = vadd.f32 %v44, %v236
    %v238 = vpop.f32.mrb[0].mxu0
    %239 = vdwg.mxu0
    %v240 = vmax.f32 %v162, 0.0
    %v241 = vmax.f32 %v167, 0.0
    %v242 = vmax.f32 %v172, 0.0
    %v243 = vmax.f32 %v177, 0.0
    %v244 = vmax.f32 %v182, 0.0
    %v245 = vmax.f32 %v187, 0.0
    %v246 = vmax.f32 %v192, 0.0
    %v247 = vmax.f32 %v197, 0.0
    %v248 = vmax.f32 %v202, 0.0
    %v249 = vmax.f32 %v207, 0.0
    %v250 = vmax.f32 %v212, 0.0
    %v251 = vmax.f32 %v217, 0.0
    %v252 = vmax.f32 %v222, 0.0
    %v253 = vmax.f32 %v227, 0.0
    %v254 = vmax.f32 %v232, 0.0
    %v255 = vmax.f32 %v237, 0.0
    %s256 = scalar_lea.vmem %s1, 32
    %v257 = vld [vmem:[%s256] sm:$0xff]
    %v258 = vld [vmem:[%s256 + $0x8] sm:$0xff]
    %v259 = vld [vmem:[%s256 + $0x10] sm:$0xff]
    %v260 = vld [vmem:[%s256 + $0x18] sm:$0xff]
    %s261 = scalar_lea.vmem %s2, 1
    %v262 = vld [vmem:[%s261] sm:$0x1]
    %v264 = vlaneseq
    %v265 = vshrl.u32 %v264, 7
    %v266 = vsub.s32 0, %v265
    %v267 = vrot.slane %v262, %v266
    %v270 = vsel %vm46, %v240, 0
    %v273 = vsel %vm46, %v241, 0
    %v276 = vsel %vm46, %v242, 0
    %v279 = vsel %vm46, %v243, 0
    %v282 = vsel %vm46, %v244, 0
    %v285 = vsel %vm46, %v245, 0
    %v288 = vsel %vm46, %v246, 0
    %v291 = vsel %vm46, %v247, 0
    %v294 = vsel %vm46, %v248, 0
    %v297 = vsel %vm46, %v249, 0
    %v300 = vsel %vm46, %v250, 0
    %v303 = vsel %vm46, %v251, 0
    %v306 = vsel %vm46, %v252, 0
    %v309 = vsel %vm46, %v253, 0
    %v312 = vsel %vm46, %v254, 0
    %v315 = vsel %vm46, %v255, 0
    %317 = vmatprep.subr.mxu0 0.0
    %318 = vmatpush1.msra.mxu0 %v257
    %319 = vmatprep.subr.mxu0 0.0
    %320 = vmatpush1.msra.mxu0 %v258
    %321 = vmatprep.subr.mxu0 0.0
    %322 = vmatpush1.msra.mxu0 %v259
    %323 = vmatprep.subr.mxu0 0.0
    %324 = vmatpush1.msra.mxu0 %v260
    %325 = vmatprep.subr.mxu0 0.0
    %326 = vmatpush1.msra.mxu0 0.0
    %327 = vmatprep.subr.mxu0 0.0
    %328 = vmatpush1.msra.mxu0 0.0
    %329 = vmatprep.subr.mxu0 0.0
    %330 = vmatpush1.msra.mxu0 0.0
    %331 = vmatprep.subr.mxu0 0.0
    %332 = vmatpush1.msra.mxu0 0.0
    %333 = vmatprep.subr.mxu0 0.0
    %334 = vmatpush1.msra.mxu0 0.0
    %335 = vmatprep.subr.mxu0 0.0
    %336 = vmatpush1.msra.mxu0 0.0
    %337 = vmatprep.subr.mxu0 0.0
    %338 = vmatpush1.msra.mxu0 0.0
    %339 = vmatprep.subr.mxu0 0.0
    %340 = vmatpush1.msra.mxu0 0.0
    %341 = vmatprep.subr.mxu0 0.0
    %342 = vmatpush1.msra.mxu0 0.0
    %343 = vmatprep.subr.mxu0 0.0
    %344 = vmatpush1.msra.mxu0 0.0
    %345 = vmatprep.subr.mxu0 0.0
    %346 = vmatpush1.msra.mxu0 0.0
    %347 = vmatprep.subr.mxu0 0.0
    %348 = vmatpush1.msra.mxu0 0.0
    %349 = vmatprep.subr.mxu0 0.0
    %350 = vmatpush1.msra.mxu0 0.0
    %351 = vmatprep.subr.mxu0 0.0
    %352 = vmatpush1.msra.mxu0 0.0
    %353 = vmatprep.subr.mxu0 0.0
    %354 = vmatpush1.msra.mxu0 0.0
    %355 = vmatprep.subr.mxu0 0.0
    %356 = vmatpush1.msra.mxu0 0.0
    %357 = vmatprep.subr.mxu0 0.0
    %358 = vmatpush1.msra.mxu0 0.0
    %359 = vmatprep.subr.mxu0 0.0
    %360 = vmatpush1.msra.mxu0 0.0
    %361 = vmatprep.subr.mxu0 0.0
    %362 = vmatpush1.msra.mxu0 0.0
    %363 = vmatprep.subr.mxu0 0.0
    %364 = vmatpush1.msra.mxu0 0.0
    %365 = vmatprep.subr.mxu0 0.0
    %366 = vmatpush1.msra.mxu0 0.0
    %367 = vmatprep.subr.mxu0 0.0
    %368 = vmatpush1.msra.mxu0 0.0
    %369 = vmatprep.subr.mxu0 0.0
    %370 = vmatpush1.msra.mxu0 0.0
    %371 = vmatprep.subr.mxu0 0.0
    %372 = vmatpush1.msra.mxu0 0.0
    %373 = vmatprep.subr.mxu0 0.0
    %374 = vmatpush1.msra.mxu0 0.0
    %375 = vmatprep.subr.mxu0 0.0
    %376 = vmatpush1.msra.mxu0 0.0
    %377 = vmatprep.subr.mxu0 0.0
    %378 = vmatpush1.msra.mxu0 0.0
    %379 = vmatprep.subr.mxu0 0.0
    %380 = vmatpush1.msra.mxu0 0.0
    %381 = vmatprep.mubr.f32.mxu0 0.0
    %382 = vmatmul.mubr.f32.gmra.mrb[0].mxu0 %v270
    %v383 = vpop.f32.mrb[0].mxu0
    %v384 = vadd.f32 %v267, %v383
    %v385 = vpop.f32.mrb[0].mxu0
    %386 = vmatprep.mubr.f32.mxu0 0.0
    %387 = vmatmul.mubr.f32.gmra.mrb[0].mxu0 %v273
    %v388 = vpop.f32.mrb[0].mxu0
    %v389 = vadd.f32 %v267, %v388
    %v390 = vpop.f32.mrb[0].mxu0
    %391 = vmatprep.mubr.f32.mxu0 0.0
    %392 = vmatmul.mubr.f32.gmra.mrb[0].mxu0 %v276
    %v393 = vpop.f32.mrb[0].mxu0
    %v394 = vadd.f32 %v267, %v393
    %v395 = vpop.f32.mrb[0].mxu0
    %396 = vmatprep.mubr.f32.mxu0 0.0
    %397 = vmatmul.mubr.f32.gmra.mrb[0].mxu0 %v279
    %v398 = vpop.f32.mrb[0].mxu0
    %v399 = vadd.f32 %v267, %v398
    %v400 = vpop.f32.mrb[0].mxu0
    %401 = vmatprep.mubr.f32.mxu0 0.0
    %402 = vmatmul.mubr.f32.gmra.mrb[0].mxu0 %v282
    %v403 = vpop.f32.mrb[0].mxu0
    %v404 = vadd.f32 %v267, %v403
    %v405 = vpop.f32.mrb[0].mxu0
    %406 = vmatprep.mubr.f32.mxu0 0.0
    %407 = vmatmul.mubr.f32.gmra.mrb[0].mxu0 %v285
    %v408 = vpop.f32.mrb[0].mxu0
    %v409 = vadd.f32 %v267, %v408
    %v410 = vpop.f32.mrb[0].mxu0
    %411 = vmatprep.mubr.f32.mxu0 0.0
    %412 = vmatmul.mubr.f32.gmra.mrb[0].mxu0 %v288
    %v413 = vpop.f32.mrb[0].mxu0
    %v414 = vadd.f32 %v267, %v413
    %v415 = vpop.f32.mrb[0].mxu0
    %416 = vmatprep.mubr.f32.mxu0 0.0
    %417 = vmatmul.mubr.f32.gmra.mrb[0].mxu0 %v291
    %v418 = vpop.f32.mrb[0].mxu0
    %v419 = vadd.f32 %v267, %v418
    %v420 = vpop.f32.mrb[0].mxu0
    %421 = vmatprep.mubr.f32.mxu0 0.0
    %422 = vmatmul.mubr.f32.gmra.mrb[0].mxu0 %v294
    %v423 = vpop.f32.mrb[0].mxu0
    %v424 = vadd.f32 %v267, %v423
    %v425 = vpop.f32.mrb[0].mxu0
    %426 = vmatprep.mubr.f32.mxu0 0.0
    %427 = vmatmul.mubr.f32.gmra.mrb[0].mxu0 %v297
    %v428 = vpop.f32.mrb[0].mxu0
    %v429 = vadd.f32 %v267, %v428
    %v430 = vpop.f32.mrb[0].mxu0
    %431 = vmatprep.mubr.f32.mxu0 0.0
    %432 = vmatmul.mubr.f32.gmra.mrb[0].mxu0 %v300
    %v433 = vpop.f32.mrb[0].mxu0
    %v434 = vadd.f32 %v267, %v433
    %v435 = vpop.f32.mrb[0].mxu0
    %436 = vmatprep.mubr.f32.mxu0 0.0
    %437 = vmatmul.mubr.f32.gmra.mrb[0].mxu0 %v303
    %v438 = vpop.f32.mrb[0].mxu0
    %v439 = vadd.f32 %v267, %v438
    %v440 = vpop.f32.mrb[0].mxu0
    %441 = vmatprep.mubr.f32.mxu0 0.0
    %442 = vmatmul.mubr.f32.gmra.mrb[0].mxu0 %v306
    %v443 = vpop.f32.mrb[0].mxu0
    %v444 = vadd.f32 %v267, %v443
    %v445 = vpop.f32.mrb[0].mxu0
    %446 = vmatprep.mubr.f32.mxu0 0.0
    %447 = vmatmul.mubr.f32.gmra.mrb[0].mxu0 %v309
    %v448 = vpop.f32.mrb[0].mxu0
    %v449 = vadd.f32 %v267, %v448
    %v450 = vpop.f32.mrb[0].mxu0
    %451 = vmatprep.mubr.f32.mxu0 0.0
    %452 = vmatmul.mubr.f32.gmra.mrb[0].mxu0 %v312
    %v453 = vpop.f32.mrb[0].mxu0
    %v454 = vadd.f32 %v267, %v453
    %v455 = vpop.f32.mrb[0].mxu0
    %456 = vmatprep.mubr.f32.mxu0 0.0
    %457 = vmatmul.mubr.f32.gmra.mrb[0].mxu0 %v315
    %v458 = vpop.f32.mrb[0].mxu0
    %v459 = vadd.f32 %v267, %v458
    %v460 = vpop.f32.mrb[0].mxu0
    %461 = vdwg.mxu0
    %v462 = vmax.f32 %v384, 0.0
    %v463 = vmax.f32 %v389, 0.0
    %v464 = vmax.f32 %v394, 0.0
    %v465 = vmax.f32 %v399, 0.0
    %v466 = vmax.f32 %v404, 0.0
    %v467 = vmax.f32 %v409, 0.0
    %v468 = vmax.f32 %v414, 0.0
    %v469 = vmax.f32 %v419, 0.0
    %v470 = vmax.f32 %v424, 0.0
    %v471 = vmax.f32 %v429, 0.0
    %v472 = vmax.f32 %v434, 0.0
    %v473 = vmax.f32 %v439, 0.0
    %v474 = vmax.f32 %v444, 0.0
    %v475 = vmax.f32 %v449, 0.0
    %v476 = vmax.f32 %v454, 0.0
    %v477 = vmax.f32 %v459, 0.0
    %s478 = scalar_lea.vmem %s2, 2
    %v479 = vld [vmem:[%s478] sm:$0x1]
    %s480 = sld [smem:[#allocation2]]
    %v481 = vstv %s480
    %v483 = vsel %vm46, %v479, 0
    %v486 = vsel %vm46, %v462, 0
    %v489 = vsel %vm46, %v463, 0
    %v492 = vsel %vm46, %v464, 0
    %v495 = vsel %vm46, %v465, 0
    %v498 = vsel %vm46, %v466, 0
    %v501 = vsel %vm46, %v467, 0
    %v504 = vsel %vm46, %v468, 0
    %v507 = vsel %vm46, %v469, 0
    %v510 = vsel %vm46, %v470, 0
    %v513 = vsel %vm46, %v471, 0
    %v516 = vsel %vm46, %v472, 0
    %v519 = vsel %vm46, %v473, 0
    %v522 = vsel %vm46, %v474, 0
    %v525 = vsel %vm46, %v475, 0
    %v528 = vsel %vm46, %v476, 0
    %v531 = vsel %vm46, %v477, 0
    %533 = vmatprep.subr.mxu0 0.0
    %534 = vmatpush1.xpose.msra.mxu0 %v486
    %535 = vmatprep.subr.mxu0 0.0
    %536 = vmatpush1.xpose.msra.mxu0 %v489
    %537 = vmatprep.subr.mxu0 0.0
    %538 = vmatpush1.xpose.msra.mxu0 %v492
    %539 = vmatprep.subr.mxu0 0.0
    %540 = vmatpush1.xpose.msra.mxu0 %v495
    %541 = vmatprep.subr.mxu0 0.0
    %542 = vmatpush1.xpose.msra.mxu0 %v498
    %543 = vmatprep.subr.mxu0 0.0
    %544 = vmatpush1.xpose.msra.mxu0 %v501
    %545 = vmatprep.subr.mxu0 0.0
    %546 = vmatpush1.xpose.msra.mxu0 %v504
    %547 = vmatprep.subr.mxu0 0.0
    %548 = vmatpush1.xpose.msra.mxu0 %v507
    %549 = vmatprep.subr.mxu0 0.0
    %550 = vmatpush1.xpose.msra.mxu0 %v510
    %551 = vmatprep.subr.mxu0 0.0
    %552 = vmatpush1.xpose.msra.mxu0 %v513
    %553 = vmatprep.subr.mxu0 0.0
    %554 = vmatpush1.xpose.msra.mxu0 %v516
    %555 = vmatprep.subr.mxu0 0.0
    %556 = vmatpush1.xpose.msra.mxu0 %v519
    %557 = vmatprep.subr.mxu0 0.0
    %558 = vmatpush1.xpose.msra.mxu0 %v522
    %559 = vmatprep.subr.mxu0 0.0
    %560 = vmatpush1.xpose.msra.mxu0 %v525
    %561 = vmatprep.subr.mxu0 0.0
    %562 = vmatpush1.xpose.msra.mxu0 %v528
    %563 = vmatprep.subr.mxu0 0.0
    %564 = vmatpush1.xpose.msra.mxu0 %v531
    %565 = vmatprep.subr.mxu0 0.0
    %566 = vmatpush1.xpose.msra.mxu0 0.0
    %567 = vmatprep.subr.mxu0 0.0
    %568 = vmatpush1.xpose.msra.mxu0 0.0
    %569 = vmatprep.subr.mxu0 0.0
    %570 = vmatpush1.xpose.msra.mxu0 0.0
    %571 = vmatprep.subr.mxu0 0.0
    %572 = vmatpush1.xpose.msra.mxu0 0.0
    %573 = vmatprep.subr.mxu0 0.0
    %574 = vmatpush1.xpose.msra.mxu0 0.0
    %575 = vmatprep.subr.mxu0 0.0
    %576 = vmatpush1.xpose.msra.mxu0 0.0
    %577 = vmatprep.subr.mxu0 0.0
    %578 = vmatpush1.xpose.msra.mxu0 0.0
    %579 = vmatprep.subr.mxu0 0.0
    %580 = vmatpush1.xpose.msra.mxu0 0.0
    %581 = vmatprep.subr.mxu0 0.0
    %582 = vmatpush1.xpose.msra.mxu0 0.0
    %583 = vmatprep.subr.mxu0 0.0
    %584 = vmatpush1.xpose.msra.mxu0 0.0
    %585 = vmatprep.subr.mxu0 0.0
    %586 = vmatpush1.xpose.msra.mxu0 0.0
    %587 = vmatprep.subr.mxu0 0.0
    %588 = vmatpush1.xpose.msra.mxu0 0.0
    %589 = vmatprep.subr.mxu0 0.0
    %590 = vmatpush1.xpose.msra.mxu0 0.0
    %591 = vmatprep.subr.mxu0 0.0
    %592 = vmatpush1.xpose.msra.mxu0 0.0
    %593 = vmatprep.subr.mxu0 0.0
    %594 = vmatpush1.xpose.msra.mxu0 0.0
    %595 = vmatprep.subr.mxu0 0.0
    %596 = vmatpush1.xpose.msra.mxu0 0.0
    %597 = vmatprep.mubr.f32.mxu0 0.0
    %598 = vmatmul.mubr.f32.gmra.mrb[0].mxu0 %v483
    %v599 = vpop.f32.mrb[0].mxu0
    %v600 = vadd.f32 %v481, %v599
    %v601 = vpop.f32.mrb[0].mxu0
    %602 = vdwg.mxu0
    %603 = vst [vmem:[#allocation3] sm:$0x1] %v600
    // Predicated region
    $region18: #{tpu_custom_call.1} parent=1 // pred_check
      _
    $region19: #{tpu_custom_call.1} parent=1 // pred_check_branch
      %605 = sbr.rel (0) target = $region21
    $region20: #{tpu_custom_call.1} parent=1 // pred_region
      %s607 = ssub.s32 16, 16
      %608 = vsyncadd [#allocation4], %s607
      %s610 = sshll.u32 [#allocation3], 4
      %s611 = int_to_ptr.vmem [resolvable:$true] %s610
      %613 = dma.vmem_to_hbm [thread:$0]  %s611, 16, %s4, [#allocation4]
    $region21: #{tpu_custom_call.1} parent=1 // pred_fallthru
      _
    // Predicated region
    $region22: #{tpu_custom_call.1} parent=1 // pred_check
      _
    $region23: #{tpu_custom_call.1} parent=1 // pred_check_branch
      %615 = sbr.rel (0) target = $region25
    $region24: #{tpu_custom_call.1} parent=1 // pred_region
      %616 = dma.done [#allocation4], 16
    $region25: #{tpu_custom_call.1} parent=1 // pred_fallthru
      _
    %617 = vsyncpa [#allocation4], 1

</llo_original>
